<compile_context>
chip_gen: v7x
topology: tpu7x:2x2x1
jax: 0.10.0
libtpu: 0.0.40
codegen_flags: <defaults>
</compile_context>

<pallas_src>
import functools

import jax
import jax.numpy as jnp
from jax import lax
from jax.experimental import pallas as pl
from jax.experimental.pallas import tpu as pltpu


def kd_loss_kernel(stu_ref, tea_ref, o_ref, *, inv_t, n_rows, tile_n, mask_rows):
    xs = stu_ref[...].astype(jnp.float32) * jnp.float32(inv_t)   # (TILE_N, C)
    xt = tea_ref[...].astype(jnp.float32) * jnp.float32(inv_t)

    if mask_rows:
        # The last row tile may run past the batch: zero out-of-range rows.
        # Zeroed rows contribute exactly 0 to the KL below (teacher == student
        # == uniform), so no second mask is needed on the reduction.
        row = (lax.broadcasted_iota(jnp.int32, xs.shape, 0)
               + pl.program_id(0) * tile_n)
        valid = row < n_rows
        xs = jnp.where(valid, xs, 0.0)
        xt = jnp.where(valid, xt, 0.0)

    # Teacher softmax statistics (unnormalized).
    mt = jnp.max(xt, axis=-1, keepdims=True)
    et = jnp.exp(xt - mt)
    zt = jnp.sum(et, axis=-1, keepdims=True)

    # Student log-softmax statistics.
    ms = jnp.max(xs, axis=-1, keepdims=True)
    es = jnp.exp(xs - ms)
    zs = jnp.sum(es, axis=-1, keepdims=True)

    # Per-row KL:  sum_c t_c * (log t_c - log s_c)
    #   = (sum_c e_t,c * (xt_c - xs_c)) / Z_t - (m_t - m_s) - log Z_t + log Z_s
    num = jnp.sum(et * (xt - xs), axis=-1, keepdims=True)        # (TILE_N, 1)
    row_kl = num / zt - (mt - ms) - jnp.log(zt) + jnp.log(zs)    # (TILE_N, 1)

    partial = jnp.sum(row_kl)
    # Lane-dense store of this block's partial sum; read back as out[0, 128*i].
    o_ref[...] = jnp.full(o_ref.shape, partial, dtype=o_ref.dtype)


def kd_loss(stu_pred, tea_pred, t=4.0, tile_n=None):
    """KD loss for 2-D logits (batch, num_classes)."""
    # TODO(synk): PyTorch also allows >2-D inputs with softmax over dim=1; the
    # kernel covers the standard 2-D (batch, classes) KD case only.
    assert stu_pred.shape == tea_pred.shape and stu_pred.ndim == 2
    n, c = stu_pred.shape
    itemsize = jnp.dtype(stu_pred.dtype).itemsize

    if tile_n is None:
        # Bound per-step footprint: 2 inputs x 2 buffers x tile (+ f32 temps)
        # stays comfortably inside every chip's scoped-VMEM default.
        tile_n = (3 * 1024 * 1024) // (4 * c * 4)
        tile_n = max(8, min(512, tile_n))
    if tile_n >= n:
        tile_n = n                          # full array dim: always a legal block
    else:
        tile_n = max(8, tile_n - tile_n % 8)

    g = pl.cdiv(n, tile_n)
    mask_rows = (n % tile_n) != 0

    kern = functools.partial(
        kd_loss_kernel,
        inv_t=1.0 / t,
        n_rows=n,
        tile_n=tile_n,
        mask_rows=mask_rows,
    )
    out = pl.pallas_call(
        kern,
        out_shape=jax.ShapeDtypeStruct((8, 128 * g), jnp.float32),
        grid=(g,),
        in_specs=[pl.BlockSpec((tile_n, c), lambda i: (i, 0)),
                  pl.BlockSpec((tile_n, c), lambda i: (i, 0))],
        out_specs=pl.BlockSpec((8, 128), lambda i: (0, i)),
        compiler_params=pltpu.CompilerParams(
            dimension_semantics=("parallel",)),
        cost_estimate=pl.CostEstimate(
            flops=10 * n * c,
            transcendentals=2 * n * c,
            bytes_accessed=2 * n * c * itemsize + 8 * 128 * g * 4),
    )(stu_pred, tea_pred)

    partials = out[0, ::128]                # (g,) partial KL sums, one per block
    return (jnp.sum(partials) * jnp.float32(t * t)
            / jnp.float32(n)).astype(jnp.float32)


def kd_loss_ref(stu_pred, tea_pred, t=4.0):
    """Pure-JAX reference mirroring the PyTorch module."""
    s = jax.nn.log_softmax(stu_pred.astype(jnp.float32) / t, axis=1)
    p = jax.nn.softmax(tea_pred.astype(jnp.float32) / t, axis=1)
    kl = jnp.sum(p * (jnp.log(p) - s))
    return (kl * (t * t) / stu_pred.shape[0]).astype(jnp.float32)


if __name__ == "__main__":
    key = jax.random.PRNGKey(0)
    k1, k2 = jax.random.split(key)
    # Small KD-style shapes: batch of 50 student/teacher logits over 100 classes.
    # (50 is deliberately not a multiple of the tile to exercise row masking.)
    n, c = 50, 100
    stu = jax.random.normal(k1, (n, c), dtype=jnp.float32) * 2.0
    tea = jax.random.normal(k2, (n, c), dtype=jnp.float32) * 2.0

    loss_fn = jax.jit(functools.partial(kd_loss, t=4.0, tile_n=16))  # grid=(4,)
    loss = loss_fn(stu, tea)
    jax.block_until_ready(loss)

    ref = kd_loss_ref(stu, tea, 4.0)
    assert loss.shape == () and loss.dtype == jnp.float32
    assert jnp.allclose(loss, ref, rtol=1e-3, atol=1e-5), (loss, ref)
    print("KERNEL_OK")
</pallas_src>

<mosaic_0001>
module attributes {stable_mosaic.version = 11 : i64} {
  func.func @kd_loss_kernel(%arg0: i32, %arg1: memref<16x100xf32, #tpu.memory_space<vmem>>, %arg2: memref<16x100xf32, #tpu.memory_space<vmem>>, %arg3: memref<8x128xf32, #tpu.memory_space<vmem>>) attributes {dimension_semantics = [#tpu.dimension_semantics<parallel>], iteration_bounds = array<i64: 4>, scalar_prefetch = 0 : i64, scratch_operands = 0 : i64, tpu.core_type = #tpu.core_type<tc>, window_params = [{transform_indices = @transform_0, window_bounds = array<i64: 16, 100>}, {transform_indices = @transform_1, window_bounds = array<i64: 16, 100>}, {transform_indices = @transform_2, window_bounds = array<i64: 8, 128>}]} {
    %c0 = arith.constant 0 : index
    %c0_0 = arith.constant 0 : index
    %0 = vector.load %arg1[%c0, %c0_0] : memref<16x100xf32, #tpu.memory_space<vmem>>, vector<16x100xf32>
    %cst = arith.constant 2.500000e-01 : f32
    %1 = vector.broadcast %cst : f32 to vector<16x100xf32>
    %2 = arith.mulf %0, %1 : vector<16x100xf32>
    %c0_1 = arith.constant 0 : index
    %c0_2 = arith.constant 0 : index
    %3 = vector.load %arg2[%c0_1, %c0_2] : memref<16x100xf32, #tpu.memory_space<vmem>>, vector<16x100xf32>
    %cst_3 = arith.constant 2.500000e-01 : f32
    %4 = vector.broadcast %cst_3 : f32 to vector<16x100xf32>
    %5 = arith.mulf %3, %4 : vector<16x100xf32>
    %6 = tpu.iota {dimensions = array<i32: 0>} : vector<16x100xi32>
    %c16_i32 = arith.constant 16 : i32
    %7 = arith.muli %arg0, %c16_i32 : i32
    %8 = vector.broadcast %7 : i32 to vector<16x100xi32>
    %9 = arith.addi %6, %8 : vector<16x100xi32>
    %c50_i32 = arith.constant 50 : i32
    %10 = vector.broadcast %c50_i32 : i32 to vector<16x100xi32>
    %11 = arith.cmpi slt, %9, %10 : vector<16x100xi32>
    %cst_4 = arith.constant 0.000000e+00 : f32
    %12 = vector.broadcast %cst_4 : f32 to vector<16x100xf32>
    %13 = arith.select %11, %2, %12 : vector<16x100xi1>, vector<16x100xf32>
    %cst_5 = arith.constant 0.000000e+00 : f32
    %14 = vector.broadcast %cst_5 : f32 to vector<16x100xf32>
    %15 = arith.select %11, %5, %14 : vector<16x100xi1>, vector<16x100xf32>
    %cst_6 = arith.constant dense<0xFF800000> : vector<16xf32>
    %16 = vector.multi_reduction <maximumf>, %15, %cst_6 [1] : vector<16x100xf32> to vector<16xf32>
    %17 = vector.shape_cast %16 : vector<16xf32> to vector<16x1xf32>
    %18 = vector.broadcast %17 : vector<16x1xf32> to vector<16x100xf32>
    %19 = arith.subf %15, %18 : vector<16x100xf32>
    %20 = math.exp %19 : vector<16x100xf32>
    %cst_7 = arith.constant dense<0.000000e+00> : vector<16xf32>
    %21 = vector.multi_reduction <add>, %20, %cst_7 [1] : vector<16x100xf32> to vector<16xf32>
    %22 = vector.shape_cast %21 : vector<16xf32> to vector<16x1xf32>
    %cst_8 = arith.constant dense<0xFF800000> : vector<16xf32>
    %23 = vector.multi_reduction <maximumf>, %13, %cst_8 [1] : vector<16x100xf32> to vector<16xf32>
    %24 = vector.shape_cast %23 : vector<16xf32> to vector<16x1xf32>
    %25 = vector.broadcast %24 : vector<16x1xf32> to vector<16x100xf32>
    %26 = arith.subf %13, %25 : vector<16x100xf32>
    %27 = math.exp %26 : vector<16x100xf32>
    %cst_9 = arith.constant dense<0.000000e+00> : vector<16xf32>
    %28 = vector.multi_reduction <add>, %27, %cst_9 [1] : vector<16x100xf32> to vector<16xf32>
    %29 = vector.shape_cast %28 : vector<16xf32> to vector<16x1xf32>
    %30 = arith.subf %15, %13 : vector<16x100xf32>
    %31 = arith.mulf %20, %30 : vector<16x100xf32>
    %cst_10 = arith.constant dense<0.000000e+00> : vector<16xf32>
    %32 = vector.multi_reduction <add>, %31, %cst_10 [1] : vector<16x100xf32> to vector<16xf32>
    %33 = vector.shape_cast %32 : vector<16xf32> to vector<16x1xf32>
    %34 = arith.divf %33, %22 : vector<16x1xf32>
    %35 = arith.subf %17, %24 : vector<16x1xf32>
    %36 = arith.subf %34, %35 : vector<16x1xf32>
    %37 = math.log %22 : vector<16x1xf32>
    %38 = arith.subf %36, %37 : vector<16x1xf32>
    %39 = math.log %29 : vector<16x1xf32>
    %40 = arith.addf %38, %39 : vector<16x1xf32>
    %41 = vector.shape_cast %40 : vector<16x1xf32> to vector<1x16x1xf32>
    %cst_11 = arith.constant dense<0.000000e+00> : vector<1xf32>
    %42 = vector.multi_reduction <add>, %41, %cst_11 [1, 2] : vector<1x16x1xf32> to vector<1xf32>
    %43 = vector.shape_cast %42 : vector<1xf32> to vector<1x1x1xf32>
    %44 = vector.extract %43[0, 0, 0] : f32 from vector<1x1x1xf32>
    %45 = vector.broadcast %44 : f32 to vector<8x128xf32>
    %c0_12 = arith.constant 0 : index
    %c0_13 = arith.constant 0 : index
    %46 = vector.load %arg3[%c0_12, %c0_13] : memref<8x128xf32, #tpu.memory_space<vmem>>, vector<8x128xf32>
    tpu.vector_store %arg3[%c0_12, %c0_13], %45 {strides = array<i32>} : memref<8x128xf32, #tpu.memory_space<vmem>>, vector<8x128xf32>,
    return
  }
  func.func @transform_0(%arg0: i32) -> (i32, i32) {
    %c0_i32 = arith.constant 0 : i32
    %c0_i32_0 = arith.constant 0 : i32
    return %arg0, %c0_i32 : i32, i32
  }
  func.func @transform_1(%arg0: i32) -> (i32, i32) {
    %c0_i32 = arith.constant 0 : i32
    %c0_i32_0 = arith.constant 0 : i32
    return %arg0, %c0_i32 : i32, i32
  }
  func.func @transform_2(%arg0: i32) -> (i32, i32) {
    %c0_i32 = arith.constant 0 : i32
    %c0_i32_0 = arith.constant 0 : i32
    return %c0_i32, %arg0 : i32, i32
  }
}

</mosaic_0001>

<llo_original>
// kernel: kd_loss.1
$region0: #{kd_loss.1}
  #allocation0 [shape = 'u32[]', space=smem, size = 0x4, offset = 0x4, fixed_abs, tag = 'smem constant byte address 0x4 - core index']
  #allocation1 [shape = 'u32[144,128]{1,0:T(1,128)}', space=vmem, size = 0x12000, scoped, tag = 'internal scratch']
  %s0 = inlined_call_operand.hbm [shape: f32[50,100], index: 0, kind: input, shape index: {}]
  %s1 = inlined_call_operand.hbm [shape: f32[50,100], index: 1, kind: input, shape index: {}]
  %s2 = inlined_call_operand.vmem [shape: f32[8,512], index: 2, kind: output, shape index: {}]
  %s3 = sld [smem:[#allocation0]]
  $region49: #{kd_loss.1} parent=0
    _
  %s5 = ssub.s32 1, %s3
  %s6 = scalar_select 0, %s5, %s3
  $region1: #{kd_loss.1} parent=0
    #allocation2 [shape = 'u8[16384]{0}', space=vmem, size = 0x4000, scoped, tag = 'input window, operand 0']
    #allocation3 [shape = 's32[2]{0}', space=sflag, size = 0x8, scoped, tag = 'scoped memory for kd_loss.1']
    #allocation4 [shape = 'u8[16384]{0}', space=vmem, size = 0x4000, scoped, tag = 'input window, operand 1']
    #allocation5 [shape = 's32[2]{0}', space=sflag, size = 0x8, scoped, tag = 'scoped memory for kd_loss.1']
    %7 = vsyncpa [#allocation3], 0
    %s8 = scalar_lea.sflag [#allocation3], 1
    %9 = vsyncpa %s8, 0
    %10 = vsyncpa [#allocation5], 0
    %s11 = scalar_lea.sflag [#allocation5], 1
    %12 = vsyncpa %s11, 0
    loop: start=0, step=1, limit=6
    $region2: #{kd_loss.1} parent=1 // loop_pre_header
      _
    $region3: #{kd_loss.1} parent=1 // loop_header
      %s14 = sphi 0, %s18
      %p15 = scmp.ge.s32.totalorder %s14, 6
      %s24 = sphi 0, %s26
      %s27 = sphi 0, %s24
      %s28 = sphi 0, %s27
      %s44 = sphi 0, %s28
      %s50 = sphi 0, %s52
      %s53 = sphi 0, %s50
      %s54 = sphi 0, %s53
      %s70 = sphi 0, %s54
      %s76 = sphi 0, %s78
      %s79 = sphi 0, %s76
      %s80 = sphi 0, %s79
      %s96 = sphi 0, %s80
    $region4: #{kd_loss.1} parent=1 // loop_header_branch
      %17 = sbr.rel (%p15) target = $region8
    $region5: #{kd_loss.1} parent=1 // loop_body
      %s19 = ssub.s32 %s14, 1
      %s20 = ssub.s32 %s14, 2
      %s21 = sadd.s32 %s14, 1
      %s22 = ssub.s32 %s14, %s21
      %p23 = scmp.eq.s32.totalorder %s22, 0
      %s25 = sadd.s32 %s24, 1
      %s26 = scalar_select %p23, %s24, %s25
      %p29 = pneg %p23
      %p30 = scmp.eq.s32.totalorder %s14, 3
      %p31 = por %p29, %p30
      %p32 = scmp.ne.s32.totalorder %s24, %s27
      %p33 = scmp.eq.s32.totalorder %s14, 0
      %p34 = por %p32, %p33
      %p35 = scmp.ne.s32.totalorder %s24, %s27
      %p36 = scmp.eq.s32.totalorder %s19, 3
      %p37 = por %p35, %p36
      %p38 = scmp.ne.s32.totalorder %s27, %s28
      %p39 = scmp.eq.s32.totalorder %s19, 0
      %p40 = por %p38, %p39
      %p41 = scmp.ne.s32.totalorder %s27, %s28
      %p42 = scmp.eq.s32.totalorder %s20, 3
      %p43 = por %p41, %p42
      %p45 = scmp.ne.s32.totalorder %s28, %s44
      %p46 = scmp.eq.s32.totalorder %s20, 0
      %p47 = por %p45, %p46
      %s48 = ssub.s32 %s14, %s21
      %p49 = scmp.eq.s32.totalorder %s48, 0
      %s51 = sadd.s32 %s50, 1
      %s52 = scalar_select %p49, %s50, %s51
      %p55 = pneg %p49
      %p56 = scmp.eq.s32.totalorder %s14, 3
      %p57 = por %p55, %p56
      %p58 = scmp.ne.s32.totalorder %s50, %s53
      %p59 = scmp.eq.s32.totalorder %s14, 0
      %p60 = por %p58, %p59
      %p61 = scmp.ne.s32.totalorder %s50, %s53
      %p62 = scmp.eq.s32.totalorder %s19, 3
      %p63 = por %p61, %p62
      %p64 = scmp.ne.s32.totalorder %s53, %s54
      %p65 = scmp.eq.s32.totalorder %s19, 0
      %p66 = por %p64, %p65
      %p67 = scmp.ne.s32.totalorder %s53, %s54
      %p68 = scmp.eq.s32.totalorder %s20, 3
      %p69 = por %p67, %p68
      %p71 = scmp.ne.s32.totalorder %s54, %s70
      %p72 = scmp.eq.s32.totalorder %s20, 0
      %p73 = por %p71, %p72
      %s74 = ssub.s32 %s14, %s21
      %p75 = scmp.eq.s32.totalorder %s74, 0
      %s77 = sadd.s32 %s76, 1
      %s78 = scalar_select %p75, %s76, %s77
      %p81 = pneg %p75
      %p82 = scmp.eq.s32.totalorder %s14, 3
      %p83 = por %p81, %p82
      %p84 = scmp.ne.s32.totalorder %s76, %s79
      %p85 = scmp.eq.s32.totalorder %s14, 0
      %p86 = por %p84, %p85
      %p87 = scmp.ne.s32.totalorder %s76, %s79
      %p88 = scmp.eq.s32.totalorder %s19, 3
      %p89 = por %p87, %p88
      %p90 = scmp.ne.s32.totalorder %s79, %s80
      %p91 = scmp.eq.s32.totalorder %s19, 0
      %p92 = por %p90, %p91
      %p93 = scmp.ne.s32.totalorder %s79, %s80
      %p94 = scmp.eq.s32.totalorder %s20, 3
      %p95 = por %p93, %p94
      %p97 = scmp.ne.s32.totalorder %s80, %s96
      %p98 = scmp.eq.s32.totalorder %s20, 0
      %p99 = por %p97, %p98
      %p100 = scmp.le.s32.totalorder 1, %s14
      %p101 = scmp.lt.s32.totalorder %s14, 5
      %p102 = pnand %p100, %p101
      %p103 = pneg %p102
      // Predicated region
      $region9: #{kd_loss.1} parent=5 // pred_check
        _
      $region10: #{kd_loss.1} parent=5 // pred_check_branch
        %105 = sbr.rel (%p102) target = $region12
      $region11: #{kd_loss.1} parent=5 // pred_region
        %s106 = ssub.s32 %s14, 1
      $region12: #{kd_loss.1} parent=5 // pred_fallthru
        _
      %p107 = scmp.lt.s32.totalorder %s14, 4
      // Predicated region
      $region13: #{kd_loss.1} parent=5 // pred_check
        %p108 = pneg %p107
      $region14: #{kd_loss.1} parent=5 // pred_check_branch
        %110 = sbr.rel (%p108) target = $region16
      $region15: #{kd_loss.1} parent=5 // pred_region
        // Predicated region
        $region17: #{kd_loss.1} parent=15 // pred_check
          %p111 = pneg %p34
        $region18: #{kd_loss.1} parent=15 // pred_check_branch
          %113 = sbr.rel (%p111) target = $region20
        $region19: #{kd_loss.1} parent=15 // pred_region
          %s114 = sand.u32 %s24, 1
          %s115 = scalar_lea.sflag [#allocation3], %s114
          %s116 = sand.u32 %s24, 1
          %s117 = smul.addr %s116, 16
          %s118 = scalar_lea.vmem [#allocation2], %s117
          %s119 = smul.u32 2, %s14
          %s120 = ssub.s32 7, %s119
          %p121 = scmp.lt.s32.totalorder %s120, 2
          %s122 = scalar_select %p121, %s120, 2
          %s123 = smul.u32 128, %s122
          %s125 = ssub.s32 256, %s123
          %126 = vsyncadd %s115, %s125
          %p127 = scmp.ne.s32.totalorder 0, %s123
          %s128 = smul.addr %s119, 128
          %s129 = scalar_lea.hbm %s0, %s128
          %s130 = smul.u32 8, %s122
          %s131 = sshll.u32 %s118, 4
          %s132 = int_to_ptr.vmem [resolvable:$true] %s131
          %s133 = sshll.u32 %s130, 4
          %137 = dma.hbm_to_vmem [thread:$0]  (%p127), %s129, %s133, %s132, %s115, 128, 128, 8
        $region20: #{kd_loss.1} parent=15 // pred_fallthru
          _
        // Predicated region
        $region21: #{kd_loss.1} parent=15 // pred_check
          %p138 = pneg %p60
        $region22: #{kd_loss.1} parent=15 // pred_check_branch
          %140 = sbr.rel (%p138) target = $region24
        $region23: #{kd_loss.1} parent=15 // pred_region
          %s141 = sand.u32 %s50, 1
          %s142 = scalar_lea.sflag [#allocation5], %s141
          %s143 = sand.u32 %s50, 1
          %s144 = smul.addr %s143, 16
          %s145 = scalar_lea.vmem [#allocation4], %s144
          %s146 = smul.u32 2, %s14
          %s147 = ssub.s32 7, %s146
          %p148 = scmp.lt.s32.totalorder %s147, 2
          %s149 = scalar_select %p148, %s147, 2
          %s150 = smul.u32 128, %s149
          %s152 = ssub.s32 256, %s150
          %153 = vsyncadd %s142, %s152
          %p154 = scmp.ne.s32.totalorder 0, %s150
          %s155 = smul.addr %s146, 128
          %s156 = scalar_lea.hbm %s1, %s155
          %s157 = smul.u32 8, %s149
          %s158 = sshll.u32 %s145, 4
          %s159 = int_to_ptr.vmem [resolvable:$true] %s158
          %s160 = sshll.u32 %s157, 4
          %164 = dma.hbm_to_vmem [thread:$0]  (%p154), %s156, %s160, %s159, %s142, 128, 128, 8
        $region24: #{kd_loss.1} parent=15 // pred_fallthru
          _
      $region16: #{kd_loss.1} parent=5 // pred_fallthru
        _
      %p165 = scmp.le.s32.totalorder 1, %s14
      %p166 = scmp.lt.s32.totalorder %s14, 5
      %p167 = pnand %p165, %p166
      %p168 = pneg %p167
      // Predicated region
      $region25: #{kd_loss.1} parent=5 // pred_check
        _
      $region26: #{kd_loss.1} parent=5 // pred_check_branch
        %170 = sbr.rel (%p167) target = $region28
      $region27: #{kd_loss.1} parent=5 // pred_region
        %s171 = ssub.s32 %s14, 1
        %s172 = sand.u32 %s27, 1
        %s173 = scalar_lea.sflag [#allocation3], %s172
        %s174 = sand.u32 %s27, 1
        %s175 = smul.addr %s174, 16
        %s176 = scalar_lea.vmem [#allocation2], %s175
        // Predicated region
        $region29: #{kd_loss.1} parent=27 // pred_check
          %p177 = pneg %p40
        $region30: #{kd_loss.1} parent=27 // pred_check_branch
          %179 = sbr.rel (%p177) target = $region32
        $region31: #{kd_loss.1} parent=27 // pred_region
          %180 = dma.done %s173, 256
        $region32: #{kd_loss.1} parent=27 // pred_fallthru
          _
        %s181 = sand.u32 %s53, 1
        %s182 = scalar_lea.sflag [#allocation5], %s181
        %s183 = sand.u32 %s53, 1
        %s184 = smul.addr %s183, 16
        %s185 = scalar_lea.vmem [#allocation4], %s184
        // Predicated region
        $region33: #{kd_loss.1} parent=27 // pred_check
          %p186 = pneg %p66
        $region34: #{kd_loss.1} parent=27 // pred_check_branch
          %188 = sbr.rel (%p186) target = $region36
        $region35: #{kd_loss.1} parent=27 // pred_region
          %189 = dma.done %s182, 256
        $region36: #{kd_loss.1} parent=27 // pred_fallthru
          _
        %s190 = sand.u32 %s27, 1
        %s191 = scalar_lea.sflag [#allocation3], %s190
        %s192 = sand.u32 %s27, 1
        %s193 = smul.addr %s192, 16
        %s194 = scalar_lea.vmem [#allocation2], %s193
        %p195 = pneg %p40
        %p196 = pneg %p37
        %s197 = sand.u32 %s53, 1
        %s198 = scalar_lea.sflag [#allocation5], %s197
        %s199 = sand.u32 %s53, 1
        %s200 = smul.addr %s199, 16
        %s201 = scalar_lea.vmem [#allocation4], %s200
        %p202 = pneg %p66
        %p203 = pneg %p63
        %p204 = pneg %p92
        %p205 = pneg %p89
        %p206 = scmp.lt.s32.totalorder %s19, 3
        %s207 = scalar_select %p206, %s19, 3
        %s208 = smul.addr %s207, 8
        %s209 = scalar_lea.vmem %s2, %s208
        %s210 = smul.u32 2, %s19
        %s211 = ssub.s32 7, %s210
        %p212 = scmp.lt.s32.totalorder %s211, 2
        %s213 = scalar_select %p212, %s211, 2
        %s214 = smul.u32 128, %s213
        %s215 = smul.u32 2, %s19
        %s216 = ssub.s32 7, %s215
        %p217 = scmp.lt.s32.totalorder %s216, 2
        %s218 = scalar_select %p217, %s216, 2
        %s219 = smul.u32 128, %s218
        %p220 = scmp.lt.s32.totalorder %s19, 3
        %s221 = scalar_select %p220, %s19, 3
        %s222 = smul.addr %s221, 8
        %s223 = scalar_lea.vmem %s2, %s222
        %v224 = vld [vmem:[%s176] sm:$0xff]
        %v225 = vld [vmem:[%s176 + $0x8] sm:$0xff]
        %v226 = vmul.f32 %v224, 0.25
        %v227 = vmul.f32 %v225, 0.25
        %v228 = vld [vmem:[%s185] sm:$0xff]
        %v229 = vld [vmem:[%s185 + $0x8] sm:$0xff]
        %v230 = vmul.f32 %v228, 0.25
        %v231 = vmul.f32 %v229, 0.25
        %v232 = vlaneseq
        %v233 = vshrl.u32 %v232, 7
        %v234 = vadd.s32 %v233, 8
        %s235 = smul.u32 %s19, 16
        %v236 = vstv %s235
        %v237 = vadd.s32 %v233, %v236
        %v238 = vadd.s32 %v234, %v236
        %vm239 = vcmp.lt.s32.totalorder %v237, 50
        %vm240 = vcmp.lt.s32.totalorder %v238, 50
        %v241 = vsel %vm239, %v226, 0.0
        %v242 = vsel %vm240, %v227, 0.0
        %v243 = vsel %vm239, %v230, 0.0
        %v244 = vsel %vm240, %v231, 0.0
        %vm245 = vcmask 818176
        %v246 = vsel %vm245, %v243, -inf
        %247 = vmax.xlane.f32.xlu0 %v246
        %v248 = vpop.xlane.xlu0 %247
        %v249 = vsel %vm245, %v244, -inf
        %250 = vmax.xlane.f32.xlu0 %v249
        %v251 = vpop.xlane.xlu0 %250
        %v252 = vsub.f32 %v243, %v248
        %v253 = vsub.f32 %v244, %v251
        %v254 = vmul.f32 %v252, 1.442695
        %v255 = vpow.pop %v254
        %v256 = vmul.f32 %v253, 1.442695
        %v257 = vpow.pop %v256
        %v258 = vsel %vm245, %v255, 0.0
        %259 = vadd.xlane.f32.xlu0 %v258
        %v260 = vpop.xlane.xlu0 %259
        %v261 = vsel %vm245, %v257, 0.0
        %262 = vadd.xlane.f32.xlu0 %v261
        %v263 = vpop.xlane.xlu0 %262
        %v264 = vsel %vm245, %v241, -inf
        %265 = vmax.xlane.f32.xlu0 %v264
        %v266 = vpop.xlane.xlu0 %265
        %v267 = vsel %vm245, %v242, -inf
        %268 = vmax.xlane.f32.xlu0 %v267
        %v269 = vpop.xlane.xlu0 %268
        %v270 = vsub.f32 %v241, %v266
        %v271 = vsub.f32 %v242, %v269
        %v272 = vmul.f32 %v270, 1.442695
        %v273 = vpow.pop %v272
        %v274 = vmul.f32 %v271, 1.442695
        %v275 = vpow.pop %v274
        %v276 = vsel %vm245, %v273, 0.0
        %277 = vadd.xlane.f32.xlu0 %v276
        %v278 = vpop.xlane.xlu0 %277
        %v279 = vsel %vm245, %v275, 0.0
        %280 = vadd.xlane.f32.xlu0 %v279
        %v281 = vpop.xlane.xlu0 %280
        %v282 = vsub.f32 %v243, %v241
        %v283 = vsub.f32 %v244, %v242
        %v284 = vmul.f32 %v255, %v282
        %v285 = vmul.f32 %v257, %v283
        %v286 = vsel %vm245, %v284, 0.0
        %287 = vadd.xlane.f32.xlu0 %v286
        %v288 = vpop.xlane.xlu0 %287
        %v289 = vsel %vm245, %v285, 0.0
        %290 = vadd.xlane.f32.xlu0 %v289
        %v291 = vpop.xlane.xlu0 %290
        %v292 = vrcp.pop %v260
        %v293 = vmul.f32 %v288, %v292
        %v294 = vrcp.pop %v263
        %v295 = vmul.f32 %v291, %v294
        %v296 = vsub.f32 %v248, %v266
        %v297 = vsub.f32 %v251, %v269
        %v298 = vsub.f32 %v293, %v296
        %v299 = vsub.f32 %v295, %v297
        %v300 = vlog2.pop %v260
        %v301 = vmul.f32 %v300, 0.6931472
        %v302 = vlog2.pop %v263
        %v303 = vmul.f32 %v302, 0.6931472
        %v304 = vsub.f32 %v298, %v301
        %v305 = vsub.f32 %v299, %v303
        %v306 = vlog2.pop %v278
        %v307 = vmul.f32 %v306, 0.6931472
        %v308 = vlog2.pop %v281
        %v309 = vmul.f32 %v308, 0.6931472
        %v310 = vadd.f32 %v304, %v307
        %v311 = vadd.f32 %v305, %v309
        %vm312 = vcmask 7168
        %v313 = vsel %vm312, %v310, 0.0
        %v314 = vsel %vm312, %v311, 0.0
        %v315 = vadd.f32 %v313, %v314
        %316 = vadd.xlane.f32.xlu0 %v315
        %v317 = vpop.xlane.xlu0 %316
        %v318 = vrot.slane %v317, 4
        %v319 = vadd.f32 %v317, %v318
        %v320 = vrot.slane %v319, 2
        %v321 = vadd.f32 %v319, %v320
        %v322 = vrot.slane %v321, 1
        %v323 = vadd.f32 %v321, %v322
        %s324 = vtos %v323
        %v325 = vstv %s324
        %326 = vst [vmem:[%s223] sm:$0xff] %v325
        %p327 = scmp.lt.s32.totalorder %s19, 3
        %s328 = scalar_select %p327, %s19, 3
        %s329 = smul.addr %s328, 8
        %s330 = scalar_lea.vmem %s2, %s329
        // Predicated region
        $region37: #{kd_loss.1} parent=27 // pred_check
          %p331 = pneg %p89
        $region38: #{kd_loss.1} parent=27 // pred_check_branch
          %333 = sbr.rel (%p331) target = $region40
        $region39: #{kd_loss.1} parent=27 // pred_region
          _
        $region40: #{kd_loss.1} parent=27 // pred_fallthru
          _
      $region28: #{kd_loss.1} parent=5 // pred_fallthru
        _
      %p334 = scmp.le.s32.totalorder 2, %s14
      // Predicated region
      $region41: #{kd_loss.1} parent=5 // pred_check
        %p335 = pneg %p334
      $region42: #{kd_loss.1} parent=5 // pred_check_branch
        %337 = sbr.rel (%p335) target = $region44
      $region43: #{kd_loss.1} parent=5 // pred_region
        %s338 = ssub.s32 %s14, 2
        // Predicated region
        $region45: #{kd_loss.1} parent=43 // pred_check
          %p339 = pneg %p95
        $region46: #{kd_loss.1} parent=43 // pred_check_branch
          %341 = sbr.rel (%p339) target = $region48
        $region47: #{kd_loss.1} parent=43 // pred_region
          %p342 = scmp.lt.s32.totalorder %s20, 3
          %s343 = scalar_select %p342, %s20, 3
          %s344 = smul.addr %s343, 8
          %s345 = scalar_lea.vmem %s2, %s344
        $region48: #{kd_loss.1} parent=43 // pred_fallthru
          _
      $region44: #{kd_loss.1} parent=5 // pred_fallthru
        _
    $region6: #{kd_loss.1} parent=1 // loop_footer
      %s18 = sadd.s32 1, %s14
    $region7: #{kd_loss.1} parent=1 // loop_footer_branch
      %13 = sbr.rel target = $region3
    $region8: #{kd_loss.1} parent=1 // loop_exit
      _
    %346 = vsyncpa [#allocation3], 1
    %s347 = scalar_lea.sflag [#allocation3], 1
    %348 = vsyncpa %s347, 1
    %349 = vsyncpa [#allocation5], 1
    %s350 = scalar_lea.sflag [#allocation5], 1
    %351 = vsyncpa %s350, 1

</llo_original>
